<compile_context>
chip_gen: v7x
topology: tpu7x:2x2x1
jax: 0.10.0
libtpu: 0.0.40
codegen_flags: <defaults>
</compile_context>

<pallas_src>
import functools

import jax
import jax.numpy as jnp
from jax.experimental import pallas as pl
from jax.experimental.pallas import tpu as pltpu

NUM_JOINTS = 22
OUT_DIM = NUM_JOINTS * 6  # 132 = 22 * 6


# ----------------------------------------------------------------------------
# Pallas kernel: fused MLP regressor  (Linear -> LeakyReLU(0.1) -> Linear)
# ----------------------------------------------------------------------------
def _regressor_kernel(x_ref, w1_ref, b1_ref, w2_ref, b2_ref, out_ref, *,
                      compute_dtype):
    # In-kernel cast of x (no-op on the f32 path): the convert rides VPU slack
    # under the MXU instead of being a separate wrapper-side XLA pass.
    x = x_ref[...].astype(compute_dtype)                              # (tm, D)
    h = jnp.dot(x, w1_ref[...], preferred_element_type=jnp.float32)   # (tm, E) f32
    h = h + b1_ref[...]                                               # f32 bias
    h = jnp.where(h >= 0.0, h, 0.1 * h)                               # LeakyReLU(0.1)
    h = h.astype(w2_ref.dtype)
    y = jnp.dot(h, w2_ref[...], preferred_element_type=jnp.float32)   # (tm, O) f32
    y = y + b2_ref[...]
    out_ref[...] = y.astype(out_ref.dtype)


def _default_row_tile(m):
    """Row-tile heuristic per the perf review."""
    if m <= 256:
        return m                      # single step; tiny-M is latency-bound
    # >= 2 grid steps so both v7x TensorCores get work; cap at 1024 rows to
    # amortize per-step pipeline overhead while staying tiny in VMEM.
    half = (m + 1) // 2
    return min(1024, ((half + 7) // 8) * 8)


def regressor_pallas(x2d, w1, b1, w2, b2, *, tm=None):
    """x2d: (M, D) f32 -> (M, OUT_DIM) f32.

    Weights are (in, out); biases are (1, out).  The matmul compute dtype is
    whatever dtype w1/w2 carry (pre-cast once via `prepare_weights`); x is
    cast inside the kernel.  Biases / activation / accumulation stay f32.
    The kernel writes the true 132-wide output directly (no padded buffer,
    no post-kernel slice).
    """
    M, D = x2d.shape
    E = w1.shape[1]
    O = w2.shape[1]
    compute_dtype = w1.dtype

    if tm is None:
        tm = _default_row_tile(M)

    grid = (pl.cdiv(M, tm),)
    kernel = functools.partial(_regressor_kernel, compute_dtype=compute_dtype)
    return pl.pallas_call(
        kernel,
        out_shape=jax.ShapeDtypeStruct((M, O), jnp.float32),
        grid_spec=pltpu.PrefetchScalarGridSpec(
            num_scalar_prefetch=0,
            grid=grid,
            in_specs=[
                pl.BlockSpec((tm, D), lambda i: (i, 0)),   # x rows (f32)
                pl.BlockSpec((D, E), lambda i: (0, 0)),    # W1 (full, resident)
                pl.BlockSpec((1, E), lambda i: (0, 0)),    # b1 (f32)
                pl.BlockSpec((E, O), lambda i: (0, 0)),    # W2 (full, resident)
                pl.BlockSpec((1, O), lambda i: (0, 0)),    # b2 (f32)
            ],
            out_specs=pl.BlockSpec((tm, O), lambda i: (i, 0)),  # direct 132-wide
        ),
        compiler_params=pltpu.CompilerParams(
            dimension_semantics=("parallel",)),
    )(x2d, w1, b1, w2, b2)


def prepare_weights(weights, compute_dtype=jnp.float32):
    """One-time weight preparation (feedback: no per-call astype/pad ops).

    Matmul weights go to `compute_dtype`; biases stay f32 (added in the f32
    accumulator inside the kernel).
    """
    return {
        "w1": weights["w1"].astype(compute_dtype),
        "b1": weights["b1"].astype(jnp.float32),
        "w2": weights["w2"].astype(compute_dtype),
        "b2": weights["b2"].astype(jnp.float32),
    }


# ----------------------------------------------------------------------------
# Synthetic forward-kinematics, SoA layout (N on the lane axis).
# TODO(synk): fk_module/body_model are not defined in the source module; this
# is a deterministic synthetic FK (plain JAX glue), not a checkpointed SMPL.
# TODO(synk): could be fused into the Pallas kernel epilogue to avoid the
# (M x 132) f32 HBM round-trip for very large B*T.
# ----------------------------------------------------------------------------
_SMPL_PARENTS = (-1, 0, 0, 0, 1, 2, 3, 4, 5, 6, 7, 8,
                 9, 9, 9, 12, 13, 14, 16, 17, 18, 19)  # 22 joints

# Joints grouped by tree depth: each level is one batch of elementwise FMAs.
_LEVELS = (
    (0,),
    (1, 2, 3),
    (4, 5, 6),
    (7, 8, 9),
    (10, 11, 12, 13, 14),
    (15, 16, 17),
    (18, 19),
    (20, 21),
)


def _rot6d_to_rotmat_soa(x6):
    """x6: (J, 6, N) -> (J, 3, 3, N) rotation matrices; N stays on lanes."""
    eps = 1e-8
    a1 = x6[:, 0:3, :]                                           # (J, 3, N)
    a2 = x6[:, 3:6, :]
    n1 = jnp.sqrt(jnp.sum(a1 * a1, axis=1, keepdims=True))
    b1 = a1 / jnp.maximum(n1, eps)
    dot = jnp.sum(b1 * a2, axis=1, keepdims=True)
    b2 = a2 - dot * b1
    n2 = jnp.sqrt(jnp.sum(b2 * b2, axis=1, keepdims=True))
    b2 = b2 / jnp.maximum(n2, eps)
    b3 = jnp.stack([                                             # cross(b1, b2)
        b1[:, 1] * b2[:, 2] - b1[:, 2] * b2[:, 1],
        b1[:, 2] * b2[:, 0] - b1[:, 0] * b2[:, 2],
        b1[:, 0] * b2[:, 1] - b1[:, 1] * b2[:, 0],
    ], axis=1)                                                   # (J, 3, N)
    # Columns of R are (b1, b2, b3)  ->  R[j, i, k, n]
    return jnp.stack([b1, b2, b3], axis=2)                       # (J, 3, 3, N)


def _mat3_mul(a, b):
    """a, b: (L, 3, 3, N) -> a @ b per (L, N); 9 explicit FMA expressions."""
    rows = []
    for i in range(3):
        cols = []
        for k in range(3):
            cols.append(a[:, i, 0] * b[:, 0, k]
                        + a[:, i, 1] * b[:, 1, k]
                        + a[:, i, 2] * b[:, 2, k])               # (L, N)
        rows.append(jnp.stack(cols, axis=1))                     # (L, 3, N)
    return jnp.stack(rows, axis=1)                               # (L, 3, 3, N)


def _mat3_vec_const(a, v):
    """a: (L, 3, 3, N), v: (L, 3) constant per joint -> (L, 3, N)."""
    comps = []
    for i in range(3):
        comps.append(a[:, i, 0] * v[:, 0, None]
                     + a[:, i, 1] * v[:, 1, None]
                     + a[:, i, 2] * v[:, 2, None])               # (L, N)
    return jnp.stack(comps, axis=1)                              # (L, 3, N)


def fk_module(global_orient6, joint_rot6, body_model):
    """(N, 6), (N, 21*6) -> joint positions (N, 22, 3). SoA, level-order."""
    n = global_orient6.shape[0]
    rots6 = jnp.concatenate(
        [global_orient6[:, None, :], joint_rot6.reshape(n, NUM_JOINTS - 1, 6)],
        axis=1)                                                  # (N, 22, 6)
    rots6 = rots6.transpose(1, 2, 0)                             # (22, 6, N)  SoA
    local_r = _rot6d_to_rotmat_soa(rots6)                        # (22, 3, 3, N)
    rest = body_model["rest_joints"]                             # (22, 3)
    parents = body_model["parents"]

    glob_r = [None] * NUM_JOINTS                                 # each (3, 3, N)
    glob_p = [None] * NUM_JOINTS                                 # each (3, N)
    glob_r[0] = local_r[0]
    glob_p[0] = jnp.broadcast_to(rest[0][:, None], (3, n))

    for level in _LEVELS[1:]:
        par = [parents[j] for j in level]
        parent_r = jnp.stack([glob_r[p] for p in par], axis=0)   # (L, 3, 3, N)
        parent_p = jnp.stack([glob_p[p] for p in par], axis=0)   # (L, 3, N)
        offsets = jnp.stack([rest[j] - rest[parents[j]] for j in level],
                            axis=0)                              # (L, 3)
        loc = local_r[jnp.array(level)]                          # (L, 3, 3, N)
        g_r = _mat3_mul(parent_r, loc)                           # (L, 3, 3, N)
        g_p = parent_p + _mat3_vec_const(parent_r, offsets)      # (L, 3, N)
        for idx, j in enumerate(level):
            glob_r[j] = g_r[idx]
            glob_p[j] = g_p[idx]

    joints = jnp.stack(glob_p, axis=0)                           # (22, 3, N)
    return joints.transpose(2, 0, 1)                             # (N, 22, 3)


# ----------------------------------------------------------------------------
# SimpleSMPL forward
# ----------------------------------------------------------------------------
def simple_smpl_forward(x, weights, body_model):
    """x: (B, T, D) -> (joint_position (B*T, 22, 3), params (B, T, 132))."""
    b, t, d = x.shape
    x2d = x.reshape(b * t, d)
    p2d = regressor_pallas(x2d, weights["w1"], weights["b1"],
                           weights["w2"], weights["b2"])
    params = p2d.reshape(b, t, OUT_DIM)

    global_orientation = params[:, :, :6]
    joint_rotation = params[:, :, 6:]
    joint_position = fk_module(global_orientation.reshape(-1, 6),
                               joint_rotation.reshape(-1, (NUM_JOINTS - 1) * 6),
                               body_model)
    joint_position = joint_position[:, :NUM_JOINTS]   # matches original module
    return joint_position, params


def init_weights(key, joint_regressor_dim, embed_dim):
    k1, k2, k3, k4 = jax.random.split(key, 4)
    scale1 = 1.0 / jnp.sqrt(joint_regressor_dim)
    scale2 = 1.0 / jnp.sqrt(embed_dim)
    return {
        # stored (in, out) so the kernel does x @ W + b
        "w1": (scale1 * jax.random.normal(k1, (joint_regressor_dim, embed_dim))
               ).astype(jnp.float32),
        "b1": (scale1 * jax.random.normal(k2, (1, embed_dim))).astype(jnp.float32),
        "w2": (scale2 * jax.random.normal(k3, (embed_dim, OUT_DIM))
               ).astype(jnp.float32),
        "b2": (scale2 * jax.random.normal(k4, (1, OUT_DIM))).astype(jnp.float32),
    }


def make_body_model(key):
    # deterministic synthetic rest-pose skeleton (22 joints, 3D)
    rest = 0.1 * jax.random.normal(key, (NUM_JOINTS, 3), dtype=jnp.float32)
    return {"rest_joints": rest, "parents": _SMPL_PARENTS}


if __name__ == "__main__":
    # small shapes: batch=2, seq=8, joint_regressor_dim=256, embed_dim=256
    B, T, D, E = 2, 8, 256, 256

    key = jax.random.PRNGKey(0)
    kx, kw, kb = jax.random.split(key, 3)
    x = jax.random.normal(kx, (B, T, D), dtype=jnp.float32)
    weights = init_weights(kw, D, E)
    body_model = make_body_model(kb)

    # Default path: f32 weights everywhere -> exact PyTorch-module semantics.
    w_f32 = prepare_weights(weights, jnp.float32)
    fwd = jax.jit(functools.partial(simple_smpl_forward, body_model=body_model))
    joint_position, params = fwd(x, w_f32)
    jax.block_until_ready((joint_position, params))

    assert params.shape == (B, T, OUT_DIM), params.shape
    assert joint_position.shape == (B * T, NUM_JOINTS, 3), joint_position.shape
    assert bool(jnp.all(jnp.isfinite(joint_position))), "non-finite joints"

    # f32 reference for the regressor (Linear -> LeakyReLU(0.1) -> Linear)
    h32 = x.reshape(-1, D) @ weights["w1"] + weights["b1"]
    h32 = jnp.where(h32 >= 0, h32, 0.1 * h32)
    p32 = (h32 @ weights["w2"] + weights["b2"]).reshape(B, T, OUT_DIM)
    err_f32 = float(jnp.max(jnp.abs(params - p32)))
    assert jnp.allclose(params, p32, atol=2e-2, rtol=2e-2), err_f32

    # bf16 fast path: weights pre-cast once, x cast inside the kernel,
    # f32 accumulation / bias / activation.  Looser tolerance vs f32 math.
    w_bf16 = prepare_weights(weights, jnp.bfloat16)
    p_bf = regressor_pallas(x.reshape(-1, D), w_bf16["w1"], w_bf16["b1"],
                            w_bf16["w2"], w_bf16["b2"]).reshape(B, T, OUT_DIM)
    jax.block_until_ready(p_bf)
    err_bf = float(jnp.max(jnp.abs(p_bf - p32)))
    assert jnp.allclose(p_bf, p32, atol=5e-2, rtol=5e-2), err_bf

    print("KERNEL_OK")
</pallas_src>

<mosaic_0001>
module attributes {stable_mosaic.version = 11 : i64} {
  func.func @_regressor_kernel(%arg0: i32, %arg1: memref<16x256xf32, #tpu.memory_space<vmem>>, %arg2: memref<256x256xf32, #tpu.memory_space<vmem>>, %arg3: memref<1x256xf32, #tpu.memory_space<vmem>>, %arg4: memref<256x132xf32, #tpu.memory_space<vmem>>, %arg5: memref<1x132xf32, #tpu.memory_space<vmem>>, %arg6: memref<16x132xf32, #tpu.memory_space<vmem>>) attributes {dimension_semantics = [#tpu.dimension_semantics<parallel>], iteration_bounds = array<i64: 1>, scalar_prefetch = 0 : i64, scratch_operands = 0 : i64, tpu.core_type = #tpu.core_type<tc>, window_params = [{transform_indices = @transform_0, window_bounds = array<i64: 16, 256>}, {pipeline_mode = #tpu.pipeline_mode<synchronous>, transform_indices = @transform_1, window_bounds = array<i64: 256, 256>}, {pipeline_mode = #tpu.pipeline_mode<synchronous>, transform_indices = @transform_2, window_bounds = array<i64: 1, 256>}, {pipeline_mode = #tpu.pipeline_mode<synchronous>, transform_indices = @transform_3, window_bounds = array<i64: 256, 132>}, {pipeline_mode = #tpu.pipeline_mode<synchronous>, transform_indices = @transform_4, window_bounds = array<i64: 1, 132>}, {transform_indices = @transform_5, window_bounds = array<i64: 16, 132>}]} {
    %c0 = arith.constant 0 : index
    %c0_0 = arith.constant 0 : index
    %0 = vector.load %arg1[%c0, %c0_0] : memref<16x256xf32, #tpu.memory_space<vmem>>, vector<16x256xf32>
    %c0_1 = arith.constant 0 : index
    %c0_2 = arith.constant 0 : index
    %1 = vector.load %arg2[%c0_1, %c0_2] : memref<256x256xf32, #tpu.memory_space<vmem>>, vector<256x256xf32>
    %cst = arith.constant dense<0.000000e+00> : vector<16x256xf32>
    %2 = tpu.matmul %0, %1, %cst {dimension_numbers = #tpu.dot_dimension_numbers<[1], [0], [0], [1], [0, 0, 1, 1], [], []>} : vector<16x256xf32>, vector<256x256xf32>, vector<16x256xf32> -> vector<16x256xf32>
    %c0_3 = arith.constant 0 : index
    %c0_4 = arith.constant 0 : index
    %3 = vector.load %arg3[%c0_3, %c0_4] : memref<1x256xf32, #tpu.memory_space<vmem>>, vector<1x256xf32>
    %4 = vector.broadcast %3 : vector<1x256xf32> to vector<16x256xf32>
    %5 = arith.addf %2, %4 : vector<16x256xf32>
    %cst_5 = arith.constant 0.000000e+00 : f32
    %6 = vector.broadcast %cst_5 : f32 to vector<16x256xf32>
    %7 = arith.cmpf oge, %5, %6 : vector<16x256xf32>
    %cst_6 = arith.constant 1.000000e-01 : f32
    %8 = vector.broadcast %cst_6 : f32 to vector<16x256xf32>
    %9 = arith.mulf %8, %5 : vector<16x256xf32>
    %10 = arith.select %7, %5, %9 : vector<16x256xi1>, vector<16x256xf32>
    %c0_7 = arith.constant 0 : index
    %c0_8 = arith.constant 0 : index
    %11 = vector.load %arg4[%c0_7, %c0_8] : memref<256x132xf32, #tpu.memory_space<vmem>>, vector<256x132xf32>
    %cst_9 = arith.constant dense<0.000000e+00> : vector<16x132xf32>
    %12 = tpu.matmul %10, %11, %cst_9 {dimension_numbers = #tpu.dot_dimension_numbers<[1], [0], [0], [1], [0, 0, 1, 1], [], []>} : vector<16x256xf32>, vector<256x132xf32>, vector<16x132xf32> -> vector<16x132xf32>
    %c0_10 = arith.constant 0 : index
    %c0_11 = arith.constant 0 : index
    %13 = vector.load %arg5[%c0_10, %c0_11] : memref<1x132xf32, #tpu.memory_space<vmem>>, vector<1x132xf32>
    %14 = vector.broadcast %13 : vector<1x132xf32> to vector<16x132xf32>
    %15 = arith.addf %12, %14 : vector<16x132xf32>
    %c0_12 = arith.constant 0 : index
    %c0_13 = arith.constant 0 : index
    %16 = vector.load %arg6[%c0_12, %c0_13] : memref<16x132xf32, #tpu.memory_space<vmem>>, vector<16x132xf32>
    tpu.vector_store %arg6[%c0_12, %c0_13], %15 {strides = array<i32>} : memref<16x132xf32, #tpu.memory_space<vmem>>, vector<16x132xf32>,
    return
  }
  func.func @transform_0(%arg0: i32) -> (i32, i32) {
    %c0_i32 = arith.constant 0 : i32
    %c0_i32_0 = arith.constant 0 : i32
    return %arg0, %c0_i32 : i32, i32
  }
  func.func @transform_1(%arg0: i32) -> (i32, i32) {
    %c0_i32 = arith.constant 0 : i32
    %c0_i32_0 = arith.constant 0 : i32
    %c0_i32_1 = arith.constant 0 : i32
    return %c0_i32, %c0_i32_0 : i32, i32
  }
  func.func @transform_2(%arg0: i32) -> (i32, i32) {
    %c0_i32 = arith.constant 0 : i32
    %c0_i32_0 = arith.constant 0 : i32
    %c0_i32_1 = arith.constant 0 : i32
    return %c0_i32, %c0_i32_0 : i32, i32
  }
  func.func @transform_3(%arg0: i32) -> (i32, i32) {
    %c0_i32 = arith.constant 0 : i32
    %c0_i32_0 = arith.constant 0 : i32
    %c0_i32_1 = arith.constant 0 : i32
    return %c0_i32, %c0_i32_0 : i32, i32
  }
  func.func @transform_4(%arg0: i32) -> (i32, i32) {
    %c0_i32 = arith.constant 0 : i32
    %c0_i32_0 = arith.constant 0 : i32
    %c0_i32_1 = arith.constant 0 : i32
    return %c0_i32, %c0_i32_0 : i32, i32
  }
  func.func @transform_5(%arg0: i32) -> (i32, i32) {
    %c0_i32 = arith.constant 0 : i32
    %c0_i32_0 = arith.constant 0 : i32
    return %arg0, %c0_i32 : i32, i32
  }
}

</mosaic_0001>

<llo_original>
// kernel: simple_smpl_forward.1
$region0: #{simple_smpl_forward.1}
  #allocation0 [shape = 'u32[]', space=smem, size = 0x4, offset = 0x4, fixed_abs, tag = 'smem constant byte address 0x4 - core index']
  #allocation1 [shape = 'u32[144,128]{1,0:T(1,128)}', space=vmem, size = 0x12000, scoped, tag = 'internal scratch']
  %s0 = inlined_call_operand.vmem [shape: f32[16,256], index: 0, kind: input, shape index: {}]
  %s1 = inlined_call_operand.vmem [shape: f32[256,256], index: 1, kind: input, shape index: {}]
  %s2 = inlined_call_operand.vmem [shape: f32[1,256], index: 2, kind: input, shape index: {}]
  %s3 = inlined_call_operand.vmem [shape: f32[256,132], index: 3, kind: input, shape index: {}]
  %s4 = inlined_call_operand.vmem [shape: f32[1,132], index: 4, kind: input, shape index: {}]
  %s5 = inlined_call_operand.vmem [shape: f32[16,132], index: 5, kind: output, shape index: {}]
  %s6 = sld [smem:[#allocation0]]
  $region30: #{simple_smpl_forward.1} parent=0
    _
  %s8 = ssub.s32 1, %s6
  %s9 = scalar_select 0, %s8, %s6
  // Predicated region
  $region2: #{simple_smpl_forward.1} parent=0 // pred_check
    _
  $region3: #{simple_smpl_forward.1} parent=0 // pred_check_branch
    %11 = sbr.rel (0) target = $region5
  $region4: #{simple_smpl_forward.1} parent=0 // pred_region
    _
  $region5: #{simple_smpl_forward.1} parent=0 // pred_fallthru
    _
  // Predicated region
  $region6: #{simple_smpl_forward.1} parent=0 // pred_check
    _
  $region7: #{simple_smpl_forward.1} parent=0 // pred_check_branch
    %13 = sbr.rel (0) target = $region9
  $region8: #{simple_smpl_forward.1} parent=0 // pred_region
    _
  $region9: #{simple_smpl_forward.1} parent=0 // pred_fallthru
    _
  // Predicated region
  $region10: #{simple_smpl_forward.1} parent=0 // pred_check
    _
  $region11: #{simple_smpl_forward.1} parent=0 // pred_check_branch
    %15 = sbr.rel (0) target = $region13
  $region12: #{simple_smpl_forward.1} parent=0 // pred_region
    _
  $region13: #{simple_smpl_forward.1} parent=0 // pred_fallthru
    _
  // Predicated region
  $region14: #{simple_smpl_forward.1} parent=0 // pred_check
    _
  $region15: #{simple_smpl_forward.1} parent=0 // pred_check_branch
    %17 = sbr.rel (0) target = $region17
  $region16: #{simple_smpl_forward.1} parent=0 // pred_region
    _
  $region17: #{simple_smpl_forward.1} parent=0 // pred_fallthru
    _
  // Predicated region
  $region18: #{simple_smpl_forward.1} parent=0 // pred_check
    _
  $region19: #{simple_smpl_forward.1} parent=0 // pred_check_branch
    %19 = sbr.rel (0) target = $region21
  $region20: #{simple_smpl_forward.1} parent=0 // pred_region
    _
  $region21: #{simple_smpl_forward.1} parent=0 // pred_fallthru
    _
  %v20 = vld [vmem:[%s0] sm:$0xff]
  %v21 = vld [vmem:[%s0 + $0x8] sm:$0xff]
  %v22 = vld [vmem:[%s0 + $0x10] sm:$0xff]
  %v23 = vld [vmem:[%s0 + $0x18] sm:$0xff]
  %v24 = vld [vmem:[%s1] sm:$0xff]
  %v25 = vld [vmem:[%s1 + $0x8] sm:$0xff]
  %v26 = vld [vmem:[%s1 + $0x10] sm:$0xff]
  %v27 = vld [vmem:[%s1 + $0x18] sm:$0xff]
  %v28 = vld [vmem:[%s1 + $0x20] sm:$0xff]
  %v29 = vld [vmem:[%s1 + $0x28] sm:$0xff]
  %v30 = vld [vmem:[%s1 + $0x30] sm:$0xff]
  %v31 = vld [vmem:[%s1 + $0x38] sm:$0xff]
  %v32 = vld [vmem:[%s1 + $0x40] sm:$0xff]
  %v33 = vld [vmem:[%s1 + $0x48] sm:$0xff]
  %v34 = vld [vmem:[%s1 + $0x50] sm:$0xff]
  %v35 = vld [vmem:[%s1 + $0x58] sm:$0xff]
  %v36 = vld [vmem:[%s1 + $0x60] sm:$0xff]
  %v37 = vld [vmem:[%s1 + $0x68] sm:$0xff]
  %v38 = vld [vmem:[%s1 + $0x70] sm:$0xff]
  %v39 = vld [vmem:[%s1 + $0x78] sm:$0xff]
  %v40 = vld [vmem:[%s1 + $0x80] sm:$0xff]
  %v41 = vld [vmem:[%s1 + $0x88] sm:$0xff]
  %v42 = vld [vmem:[%s1 + $0x90] sm:$0xff]
  %v43 = vld [vmem:[%s1 + $0x98] sm:$0xff]
  %v44 = vld [vmem:[%s1 + $0xa0] sm:$0xff]
  %v45 = vld [vmem:[%s1 + $0xa8] sm:$0xff]
  %v46 = vld [vmem:[%s1 + $0xb0] sm:$0xff]
  %v47 = vld [vmem:[%s1 + $0xb8] sm:$0xff]
  %v48 = vld [vmem:[%s1 + $0xc0] sm:$0xff]
  %v49 = vld [vmem:[%s1 + $0xc8] sm:$0xff]
  %v50 = vld [vmem:[%s1 + $0xd0] sm:$0xff]
  %v51 = vld [vmem:[%s1 + $0xd8] sm:$0xff]
  %v52 = vld [vmem:[%s1 + $0xe0] sm:$0xff]
  %v53 = vld [vmem:[%s1 + $0xe8] sm:$0xff]
  %v54 = vld [vmem:[%s1 + $0xf0] sm:$0xff]
  %v55 = vld [vmem:[%s1 + $0xf8] sm:$0xff]
  %v56 = vld [vmem:[%s1 + $0x100] sm:$0xff]
  %v57 = vld [vmem:[%s1 + $0x108] sm:$0xff]
  %v58 = vld [vmem:[%s1 + $0x110] sm:$0xff]
  %v59 = vld [vmem:[%s1 + $0x118] sm:$0xff]
  %v60 = vld [vmem:[%s1 + $0x120] sm:$0xff]
  %v61 = vld [vmem:[%s1 + $0x128] sm:$0xff]
  %v62 = vld [vmem:[%s1 + $0x130] sm:$0xff]
  %v63 = vld [vmem:[%s1 + $0x138] sm:$0xff]
  %v64 = vld [vmem:[%s1 + $0x140] sm:$0xff]
  %v65 = vld [vmem:[%s1 + $0x148] sm:$0xff]
  %v66 = vld [vmem:[%s1 + $0x150] sm:$0xff]
  %v67 = vld [vmem:[%s1 + $0x158] sm:$0xff]
  %v68 = vld [vmem:[%s1 + $0x160] sm:$0xff]
  %v69 = vld [vmem:[%s1 + $0x168] sm:$0xff]
  %v70 = vld [vmem:[%s1 + $0x170] sm:$0xff]
  %v71 = vld [vmem:[%s1 + $0x178] sm:$0xff]
  %v72 = vld [vmem:[%s1 + $0x180] sm:$0xff]
  %v73 = vld [vmem:[%s1 + $0x188] sm:$0xff]
  %v74 = vld [vmem:[%s1 + $0x190] sm:$0xff]
  %v75 = vld [vmem:[%s1 + $0x198] sm:$0xff]
  %v76 = vld [vmem:[%s1 + $0x1a0] sm:$0xff]
  %v77 = vld [vmem:[%s1 + $0x1a8] sm:$0xff]
  %v78 = vld [vmem:[%s1 + $0x1b0] sm:$0xff]
  %v79 = vld [vmem:[%s1 + $0x1b8] sm:$0xff]
  %v80 = vld [vmem:[%s1 + $0x1c0] sm:$0xff]
  %v81 = vld [vmem:[%s1 + $0x1c8] sm:$0xff]
  %v82 = vld [vmem:[%s1 + $0x1d0] sm:$0xff]
  %v83 = vld [vmem:[%s1 + $0x1d8] sm:$0xff]
  %v84 = vld [vmem:[%s1 + $0x1e0] sm:$0xff]
  %v85 = vld [vmem:[%s1 + $0x1e8] sm:$0xff]
  %v86 = vld [vmem:[%s1 + $0x1f0] sm:$0xff]
  %v87 = vld [vmem:[%s1 + $0x1f8] sm:$0xff]
  %v88 = vld [vmem:[%s2] sm:$0x3]
  %v90 = vlaneseq
  %v91 = vshrl.u32 %v90, 7
  %v92 = vsub.s32 0, %v91
  %v93 = vrot.slane %v88, %v92
  %v94 = vlaneseq
  %v95 = vshrl.u32 %v94, 7
  %v96 = vsub.s32 1, %v95
  %v97 = vrot.slane %v88, %v96
  %100 = vmatprep.subr.mxu0 %v25
  %101 = vmatpush1.msra.mxu0 %v24
  %102 = vmatprep.subr.mxu0 %v27
  %103 = vmatpush1.msra.mxu0 %v26
  %104 = vmatprep.subr.mxu0 %v29
  %105 = vmatpush1.msra.mxu0 %v28
  %106 = vmatprep.subr.mxu0 %v31
  %107 = vmatpush1.msra.mxu0 %v30
  %108 = vmatprep.subr.mxu0 %v33
  %109 = vmatpush1.msra.mxu0 %v32
  %110 = vmatprep.subr.mxu0 %v35
  %111 = vmatpush1.msra.mxu0 %v34
  %112 = vmatprep.subr.mxu0 %v37
  %113 = vmatpush1.msra.mxu0 %v36
  %114 = vmatprep.subr.mxu0 %v39
  %115 = vmatpush1.msra.mxu0 %v38
  %116 = vmatprep.subr.mxu0 %v41
  %117 = vmatpush1.msra.mxu0 %v40
  %118 = vmatprep.subr.mxu0 %v43
  %119 = vmatpush1.msra.mxu0 %v42
  %120 = vmatprep.subr.mxu0 %v45
  %121 = vmatpush1.msra.mxu0 %v44
  %122 = vmatprep.subr.mxu0 %v47
  %123 = vmatpush1.msra.mxu0 %v46
  %124 = vmatprep.subr.mxu0 %v49
  %125 = vmatpush1.msra.mxu0 %v48
  %126 = vmatprep.subr.mxu0 %v51
  %127 = vmatpush1.msra.mxu0 %v50
  %128 = vmatprep.subr.mxu0 %v53
  %129 = vmatpush1.msra.mxu0 %v52
  %130 = vmatprep.subr.mxu0 %v55
  %131 = vmatpush1.msra.mxu0 %v54
  %132 = vmatprep.subr.mxu0 %v57
  %133 = vmatpush1.msra.mxu0 %v56
  %134 = vmatprep.subr.mxu0 %v59
  %135 = vmatpush1.msra.mxu0 %v58
  %136 = vmatprep.subr.mxu0 %v61
  %137 = vmatpush1.msra.mxu0 %v60
  %138 = vmatprep.subr.mxu0 %v63
  %139 = vmatpush1.msra.mxu0 %v62
  %140 = vmatprep.subr.mxu0 %v65
  %141 = vmatpush1.msra.mxu0 %v64
  %142 = vmatprep.subr.mxu0 %v67
  %143 = vmatpush1.msra.mxu0 %v66
  %144 = vmatprep.subr.mxu0 %v69
  %145 = vmatpush1.msra.mxu0 %v68
  %146 = vmatprep.subr.mxu0 %v71
  %147 = vmatpush1.msra.mxu0 %v70
  %148 = vmatprep.subr.mxu0 %v73
  %149 = vmatpush1.msra.mxu0 %v72
  %150 = vmatprep.subr.mxu0 %v75
  %151 = vmatpush1.msra.mxu0 %v74
  %152 = vmatprep.subr.mxu0 %v77
  %153 = vmatpush1.msra.mxu0 %v76
  %154 = vmatprep.subr.mxu0 %v79
  %155 = vmatpush1.msra.mxu0 %v78
  %156 = vmatprep.subr.mxu0 %v81
  %157 = vmatpush1.msra.mxu0 %v80
  %158 = vmatprep.subr.mxu0 %v83
  %159 = vmatpush1.msra.mxu0 %v82
  %160 = vmatprep.subr.mxu0 %v85
  %161 = vmatpush1.msra.mxu0 %v84
  %162 = vmatprep.subr.mxu0 %v87
  %163 = vmatpush1.msra.mxu0 %v86
  %164 = vmatprep.mubr.f32.mxu0 %v21
  %165 = vmatmul.mubr.f32.gmra.mrb[0].mxu0 %v20
  %v166 = vpop.f32.mrb[0].mxu0
  %v167 = vadd.f32 %v93, %v166
  %v168 = vpop.f32.mrb[0].mxu0
  %v169 = vadd.f32 %v97, %v168
  %170 = vmatprep.mubr.f32.mxu0 %v23
  %171 = vmatmul.mubr.f32.gmra.mrb[0].mxu0 %v22
  %v172 = vpop.f32.mrb[0].mxu0
  %v173 = vadd.f32 %v93, %v172
  %v174 = vpop.f32.mrb[0].mxu0
  %v175 = vadd.f32 %v97, %v174
  %176 = vdwg.mxu0
  %vm177 = vcmp.ge.f32.partialorder %v167, 0.0
  %vm178 = vcmp.ge.f32.partialorder %v169, 0.0
  %vm179 = vcmp.ge.f32.partialorder %v173, 0.0
  %vm180 = vcmp.ge.f32.partialorder %v175, 0.0
  %v181 = vmul.f32 %v167, 0.1
  %v182 = vmul.f32 %v169, 0.1
  %v183 = vmul.f32 %v173, 0.1
  %v184 = vmul.f32 %v175, 0.1
  %v185 = vsel %vm177, %v167, %v181
  %v186 = vsel %vm178, %v169, %v182
  %v187 = vsel %vm179, %v173, %v183
  %v188 = vsel %vm180, %v175, %v184
  %v189 = vld [vmem:[%s3] sm:$0xff]
  %v190 = vld [vmem:[%s3 + $0x8] sm:$0xff]
  %v191 = vld [vmem:[%s3 + $0x10] sm:$0xff]
  %v192 = vld [vmem:[%s3 + $0x18] sm:$0xff]
  %v193 = vld [vmem:[%s3 + $0x20] sm:$0xff]
  %v194 = vld [vmem:[%s3 + $0x28] sm:$0xff]
  %v195 = vld [vmem:[%s3 + $0x30] sm:$0xff]
  %v196 = vld [vmem:[%s3 + $0x38] sm:$0xff]
  %v197 = vld [vmem:[%s3 + $0x40] sm:$0xff]
  %v198 = vld [vmem:[%s3 + $0x48] sm:$0xff]
  %v199 = vld [vmem:[%s3 + $0x50] sm:$0xff]
  %v200 = vld [vmem:[%s3 + $0x58] sm:$0xff]
  %v201 = vld [vmem:[%s3 + $0x60] sm:$0xff]
  %v202 = vld [vmem:[%s3 + $0x68] sm:$0xff]
  %v203 = vld [vmem:[%s3 + $0x70] sm:$0xff]
  %v204 = vld [vmem:[%s3 + $0x78] sm:$0xff]
  %v205 = vld [vmem:[%s3 + $0x80] sm:$0xff]
  %v206 = vld [vmem:[%s3 + $0x88] sm:$0xff]
  %v207 = vld [vmem:[%s3 + $0x90] sm:$0xff]
  %v208 = vld [vmem:[%s3 + $0x98] sm:$0xff]
  %v209 = vld [vmem:[%s3 + $0xa0] sm:$0xff]
  %v210 = vld [vmem:[%s3 + $0xa8] sm:$0xff]
  %v211 = vld [vmem:[%s3 + $0xb0] sm:$0xff]
  %v212 = vld [vmem:[%s3 + $0xb8] sm:$0xff]
  %v213 = vld [vmem:[%s3 + $0xc0] sm:$0xff]
  %v214 = vld [vmem:[%s3 + $0xc8] sm:$0xff]
  %v215 = vld [vmem:[%s3 + $0xd0] sm:$0xff]
  %v216 = vld [vmem:[%s3 + $0xd8] sm:$0xff]
  %v217 = vld [vmem:[%s3 + $0xe0] sm:$0xff]
  %v218 = vld [vmem:[%s3 + $0xe8] sm:$0xff]
  %v219 = vld [vmem:[%s3 + $0xf0] sm:$0xff]
  %v220 = vld [vmem:[%s3 + $0xf8] sm:$0xff]
  %v221 = vld [vmem:[%s3 + $0x100] sm:$0xff]
  %v222 = vld [vmem:[%s3 + $0x108] sm:$0xff]
  %v223 = vld [vmem:[%s3 + $0x110] sm:$0xff]
  %v224 = vld [vmem:[%s3 + $0x118] sm:$0xff]
  %v225 = vld [vmem:[%s3 + $0x120] sm:$0xff]
  %v226 = vld [vmem:[%s3 + $0x128] sm:$0xff]
  %v227 = vld [vmem:[%s3 + $0x130] sm:$0xff]
  %v228 = vld [vmem:[%s3 + $0x138] sm:$0xff]
  %v229 = vld [vmem:[%s3 + $0x140] sm:$0xff]
  %v230 = vld [vmem:[%s3 + $0x148] sm:$0xff]
  %v231 = vld [vmem:[%s3 + $0x150] sm:$0xff]
  %v232 = vld [vmem:[%s3 + $0x158] sm:$0xff]
  %v233 = vld [vmem:[%s3 + $0x160] sm:$0xff]
  %v234 = vld [vmem:[%s3 + $0x168] sm:$0xff]
  %v235 = vld [vmem:[%s3 + $0x170] sm:$0xff]
  %v236 = vld [vmem:[%s3 + $0x178] sm:$0xff]
  %v237 = vld [vmem:[%s3 + $0x180] sm:$0xff]
  %v238 = vld [vmem:[%s3 + $0x188] sm:$0xff]
  %v239 = vld [vmem:[%s3 + $0x190] sm:$0xff]
  %v240 = vld [vmem:[%s3 + $0x198] sm:$0xff]
  %v241 = vld [vmem:[%s3 + $0x1a0] sm:$0xff]
  %v242 = vld [vmem:[%s3 + $0x1a8] sm:$0xff]
  %v243 = vld [vmem:[%s3 + $0x1b0] sm:$0xff]
  %v244 = vld [vmem:[%s3 + $0x1b8] sm:$0xff]
  %v245 = vld [vmem:[%s3 + $0x1c0] sm:$0xff]
  %v246 = vld [vmem:[%s3 + $0x1c8] sm:$0xff]
  %v247 = vld [vmem:[%s3 + $0x1d0] sm:$0xff]
  %v248 = vld [vmem:[%s3 + $0x1d8] sm:$0xff]
  %v249 = vld [vmem:[%s3 + $0x1e0] sm:$0xff]
  %v250 = vld [vmem:[%s3 + $0x1e8] sm:$0xff]
  %v251 = vld [vmem:[%s3 + $0x1f0] sm:$0xff]
  %v252 = vld [vmem:[%s3 + $0x1f8] sm:$0xff]
  %v253 = vld [vmem:[%s4] sm:$0x3]
  %v255 = vlaneseq
  %v256 = vshrl.u32 %v255, 7
  %v257 = vsub.s32 0, %v256
  %v258 = vrot.slane %v253, %v257
  %v259 = vlaneseq
  %v260 = vshrl.u32 %v259, 7
  %v261 = vsub.s32 1, %v260
  %v262 = vrot.slane %v253, %v261
  %265 = vmatprep.subr.mxu0 %v190
  %266 = vmatpush1.msra.mxu0 %v189
  %267 = vmatprep.subr.mxu0 %v192
  %268 = vmatpush1.msra.mxu0 %v191
  %269 = vmatprep.subr.mxu0 %v194
  %270 = vmatpush1.msra.mxu0 %v193
  %271 = vmatprep.subr.mxu0 %v196
  %272 = vmatpush1.msra.mxu0 %v195
  %273 = vmatprep.subr.mxu0 %v198
  %274 = vmatpush1.msra.mxu0 %v197
  %275 = vmatprep.subr.mxu0 %v200
  %276 = vmatpush1.msra.mxu0 %v199
  %277 = vmatprep.subr.mxu0 %v202
  %278 = vmatpush1.msra.mxu0 %v201
  %279 = vmatprep.subr.mxu0 %v204
  %280 = vmatpush1.msra.mxu0 %v203
  %281 = vmatprep.subr.mxu0 %v206
  %282 = vmatpush1.msra.mxu0 %v205
  %283 = vmatprep.subr.mxu0 %v208
  %284 = vmatpush1.msra.mxu0 %v207
  %285 = vmatprep.subr.mxu0 %v210
  %286 = vmatpush1.msra.mxu0 %v209
  %287 = vmatprep.subr.mxu0 %v212
  %288 = vmatpush1.msra.mxu0 %v211
  %289 = vmatprep.subr.mxu0 %v214
  %290 = vmatpush1.msra.mxu0 %v213
  %291 = vmatprep.subr.mxu0 %v216
  %292 = vmatpush1.msra.mxu0 %v215
  %293 = vmatprep.subr.mxu0 %v218
  %294 = vmatpush1.msra.mxu0 %v217
  %295 = vmatprep.subr.mxu0 %v220
  %296 = vmatpush1.msra.mxu0 %v219
  %297 = vmatprep.subr.mxu0 %v222
  %298 = vmatpush1.msra.mxu0 %v221
  %299 = vmatprep.subr.mxu0 %v224
  %300 = vmatpush1.msra.mxu0 %v223
  %301 = vmatprep.subr.mxu0 %v226
  %302 = vmatpush1.msra.mxu0 %v225
  %303 = vmatprep.subr.mxu0 %v228
  %304 = vmatpush1.msra.mxu0 %v227
  %305 = vmatprep.subr.mxu0 %v230
  %306 = vmatpush1.msra.mxu0 %v229
  %307 = vmatprep.subr.mxu0 %v232
  %308 = vmatpush1.msra.mxu0 %v231
  %309 = vmatprep.subr.mxu0 %v234
  %310 = vmatpush1.msra.mxu0 %v233
  %311 = vmatprep.subr.mxu0 %v236
  %312 = vmatpush1.msra.mxu0 %v235
  %313 = vmatprep.subr.mxu0 %v238
  %314 = vmatpush1.msra.mxu0 %v237
  %315 = vmatprep.subr.mxu0 %v240
  %316 = vmatpush1.msra.mxu0 %v239
  %317 = vmatprep.subr.mxu0 %v242
  %318 = vmatpush1.msra.mxu0 %v241
  %319 = vmatprep.subr.mxu0 %v244
  %320 = vmatpush1.msra.mxu0 %v243
  %321 = vmatprep.subr.mxu0 %v246
  %322 = vmatpush1.msra.mxu0 %v245
  %323 = vmatprep.subr.mxu0 %v248
  %324 = vmatpush1.msra.mxu0 %v247
  %325 = vmatprep.subr.mxu0 %v250
  %326 = vmatpush1.msra.mxu0 %v249
  %327 = vmatprep.subr.mxu0 %v252
  %328 = vmatpush1.msra.mxu0 %v251
  %329 = vmatprep.mubr.f32.mxu0 %v186
  %330 = vmatmul.mubr.f32.gmra.mrb[0].mxu0 %v185
  %v331 = vpop.f32.mrb[0].mxu0
  %v332 = vadd.f32 %v258, %v331
  %v333 = vpop.f32.mrb[0].mxu0
  %v334 = vadd.f32 %v262, %v333
  %335 = vmatprep.mubr.f32.mxu0 %v188
  %336 = vmatmul.mubr.f32.gmra.mrb[0].mxu0 %v187
  %v337 = vpop.f32.mrb[0].mxu0
  %v338 = vadd.f32 %v258, %v337
  %v339 = vpop.f32.mrb[0].mxu0
  %v340 = vadd.f32 %v262, %v339
  %341 = vdwg.mxu0
  %342 = vst [vmem:[%s5] sm:$0xff] %v332
  %vm343 = vcmask 31744
  %344 = vst.msk [vmem:[%s5 + $0x8] sm:$0xff] %vm343, %v334
  %345 = vst [vmem:[%s5 + $0x10] sm:$0xff] %v338
  %346 = vst.msk [vmem:[%s5 + $0x18] sm:$0xff] %vm343, %v340
  // Predicated region
  $region22: #{simple_smpl_forward.1} parent=0 // pred_check
    _
  $region23: #{simple_smpl_forward.1} parent=0 // pred_check_branch
    %348 = sbr.rel (0) target = $region25
  $region24: #{simple_smpl_forward.1} parent=0 // pred_region
    _
  $region25: #{simple_smpl_forward.1} parent=0 // pred_fallthru
    _
  // Predicated region
  $region26: #{simple_smpl_forward.1} parent=0 // pred_check
    _
  $region27: #{simple_smpl_forward.1} parent=0 // pred_check_branch
    %350 = sbr.rel (0) target = $region29
  $region28: #{simple_smpl_forward.1} parent=0 // pred_region
    _
  $region29: #{simple_smpl_forward.1} parent=0 // pred_fallthru
    _

</llo_original>
